<compile_context>
chip_gen: v7x
topology: tpu7x:2x2x1
jax: 0.10.0
libtpu: 0.0.40
codegen_flags: <defaults>
</compile_context>

<pallas_src>
import functools

import jax
import jax.numpy as jnp
from jax.experimental import pallas as pl
from jax.experimental.pallas import tpu as pltpu


_F32_BYTES = 4
_ROW_OVERHEAD_BYTES = 4096          # lane-padded (TN,1) scratch + y/loss blocks, per row
_MAX_BLOCK_ROWS = 2048
_MIN_ROWS_FOR_FULL_C = 256
_VMEM_HEADROOM = 8 * 1024 * 1024


def _vmem_limit_bytes():
    """Generation-gated VMEM limit (per TensorCore)."""
    cap = 64 * 1024 * 1024          # conservative default: v7x-class (64 MiB)
    try:
        if hasattr(pltpu, "get_tpu_info"):
            info = pltpu.get_tpu_info()
            for attr in ("vmem_capacity_bytes", "vmem_size_bytes", "vmem_bytes"):
                v = getattr(info, attr, None)
                if v is not None:
                    cap = int(v)
                    break
    except Exception:
        pass
    if cap >= 96 * 1024 * 1024:     # v5e / v6e class parts (128 MiB VMEM)
        return 100 * 1024 * 1024
    return 48 * 1024 * 1024         # v7x class (64 MiB physical)


def _ce_single_tile_kernel(logits_ref, y_ref, loss_ref):
    """Whole class dim in one tile: direct logsumexp, no streaming state."""
    x = logits_ref[...]                                        # (TN, C) input dtype
    lane = jax.lax.broadcasted_iota(jnp.int32, x.shape, 1)     # tile-local class ids
    y = y_ref[...]                                             # (TN, 1) int32

    m = jnp.max(x, axis=-1, keepdims=True).astype(jnp.float32)
    p = jnp.exp(x.astype(jnp.float32) - m)
    lse = m + jnp.log(jnp.sum(p, axis=-1, keepdims=True))
    # Exactly one lane matches per row -> masked row-sum gathers the target logit.
    t = jnp.sum(jnp.where(lane == y, x, 0), axis=-1,
                keepdims=True).astype(jnp.float32)
    loss_ref[...] = lse - t


def _ce_streaming_kernel(logits_ref, y_ref, loss_ref, m_ref, l_ref, t_ref, *,
                         block_cols, mask_last, last_valid):
    """Online (streaming) logsumexp over class tiles."""
    j = pl.program_id(1)
    last = pl.num_programs(1) - 1

    @pl.when(j == 0)
    def _():
        m_ref[...] = jnp.full(m_ref.shape, -jnp.inf, dtype=jnp.float32)
        l_ref[...] = jnp.zeros(l_ref.shape, dtype=jnp.float32)
        t_ref[...] = jnp.zeros(t_ref.shape, dtype=jnp.float32)

    x = logits_ref[...]                                        # (TN, TC) input dtype
    lane = jax.lax.broadcasted_iota(jnp.int32, x.shape, 1)     # tile-local class ids
    # Fold the class-tile offset into the (TN,1) target index instead of a
    # full-tile global iota add (saves a per-element VALU op per tile).
    y_local = y_ref[...] - j * block_cols                      # (TN, 1) int32

    def update(xv):
        m_prev = m_ref[...]
        m_new = jnp.maximum(
            m_prev, jnp.max(xv, axis=-1, keepdims=True).astype(jnp.float32))
        p = jnp.exp(xv.astype(jnp.float32) - m_new)
        l_ref[...] = (jnp.exp(m_prev - m_new) * l_ref[...]
                      + jnp.sum(p, axis=-1, keepdims=True))
        m_ref[...] = m_new
        # Out-of-range / padded lanes never match y_local, so the raw tile is safe.
        t_ref[...] += jnp.sum(jnp.where(lane == y_local, xv, 0), axis=-1,
                              keepdims=True).astype(jnp.float32)

    if mask_last:
        @pl.when(j != last)
        def _():
            update(x)                                          # full tiles: no mask work

        @pl.when(j == last)
        def _():
            neg_inf = jnp.asarray(-jnp.inf, dtype=x.dtype)
            update(jnp.where(lane < last_valid, x, neg_inf))   # static lane limit
    else:
        update(x)

    @pl.when(j == last)
    def _():
        loss_ref[...] = m_ref[...] + jnp.log(l_ref[...]) - t_ref[...]


def cross_entropy_loss(logits, y, *, block_rows=None, block_cols=None):
    """Mean cross-entropy loss over the batch (Pallas TPU kernel).

    Matches torch.nn.CrossEntropyLoss(reduction='mean') with integer targets.
    # TODO(synk): no ignore_index / class-weight / label-smoothing support;
    # out-of-range targets (e.g. -100) silently contribute logsumexp(row)
    # instead of being ignored / raising like torch.
    """
    n, c = logits.shape
    itemsize = jnp.dtype(logits.dtype).itemsize
    row_align = max(8, 32 // itemsize)          # f32: 8, bf16: 16, int8/fp8: 32

    vmem_limit = _vmem_limit_bytes()
    budget = vmem_limit - _VMEM_HEADROOM
    # Budget at f32 width: double-buffered input DMAs + ~2 promoted f32
    # temporaries live per tile.
    bytes_per_elem = 2 * itemsize + 2 * _F32_BYTES

    if block_cols is None:
        if _MIN_ROWS_FOR_FULL_C * (c * bytes_per_elem + _ROW_OVERHEAD_BYTES) <= budget:
            block_cols = c
        else:
            cols_fit = (budget // _MIN_ROWS_FOR_FULL_C
                        - _ROW_OVERHEAD_BYTES) // bytes_per_elem
            block_cols = max(128, (cols_fit // 128) * 128)
    block_cols = min(block_cols, c)

    if block_rows is None:
        rows_fit = budget // (block_cols * bytes_per_elem + _ROW_OVERHEAD_BYTES)
        rows_fit = int(min(max(rows_fit, row_align), _MAX_BLOCK_ROWS))
        if rows_fit >= n:
            if n >= 2 * row_align:
                # Split rows into >= 2 blocks so both v7x TensorCores get work
                # (harmless on single-core parts: one extra ~0.35us grid step).
                half = pl.cdiv(n, 2)
                block_rows = max(row_align, (half // row_align) * row_align)
            else:
                block_rows = n                  # full dim: always a legal block
        else:
            block_rows = max(row_align, (rows_fit // row_align) * row_align)

    num_row_blocks = pl.cdiv(n, block_rows)
    y2d = y.astype(jnp.int32).reshape(n, 1)
    out_shape = jax.ShapeDtypeStruct((n, 1), jnp.float32)
    make_params = functools.partial(pltpu.CompilerParams,
                                    vmem_limit_bytes=vmem_limit)

    if block_cols >= c:
        # Fast path: whole class dim in one tile -> no scratch / streaming state.
        losses = pl.pallas_call(
            _ce_single_tile_kernel,
            out_shape=out_shape,
            grid_spec=pltpu.PrefetchScalarGridSpec(
                num_scalar_prefetch=0,
                grid=(num_row_blocks,),
                in_specs=[
                    pl.BlockSpec((block_rows, c), lambda i: (i, 0)),
                    pl.BlockSpec((block_rows, 1), lambda i: (i, 0)),
                ],
                out_specs=pl.BlockSpec((block_rows, 1), lambda i: (i, 0)),
            ),
            compiler_params=make_params(dimension_semantics=("parallel",)),
        )(logits, y2d)
    else:
        num_col_blocks = pl.cdiv(c, block_cols)
        mask_last = (c % block_cols) != 0
        last_valid = c - (num_col_blocks - 1) * block_cols
        kernel = functools.partial(
            _ce_streaming_kernel,
            block_cols=block_cols,
            mask_last=mask_last,
            last_valid=last_valid,
        )
        losses = pl.pallas_call(
            kernel,
            out_shape=out_shape,
            grid_spec=pltpu.PrefetchScalarGridSpec(
                num_scalar_prefetch=0,
                grid=(num_row_blocks, num_col_blocks),
                in_specs=[
                    pl.BlockSpec((block_rows, block_cols), lambda i, j: (i, j)),
                    pl.BlockSpec((block_rows, 1), lambda i, j: (i, 0)),
                ],
                out_specs=pl.BlockSpec((block_rows, 1), lambda i, j: (i, 0)),
                scratch_shapes=[
                    pltpu.VMEM((block_rows, 1), jnp.float32),   # running max
                    pltpu.VMEM((block_rows, 1), jnp.float32),   # running sum(exp)
                    pltpu.VMEM((block_rows, 1), jnp.float32),   # target logit
                ],
            ),
            compiler_params=make_params(
                dimension_semantics=("parallel", "arbitrary")),
        )(logits, y2d)

    # Final mean reduction in plain JAX (tiny); keeps the row axis "parallel".
    return jnp.mean(losses)


if __name__ == "__main__":
    key = jax.random.PRNGKey(0)
    k1, k2, k3, k4 = jax.random.split(key, 4)

    # Test 1: small shapes consistent with the module (batch=16, classes=32)
    # -> single-class-tile fast path, 2 row blocks (both v7x cores).
    N, C = 16, 32
    logits = jax.random.normal(k1, (N, C), dtype=jnp.float32)
    y = jax.random.randint(k2, (N,), 0, C, dtype=jnp.int32)
    loss = cross_entropy_loss(logits, y)
    jax.block_until_ready(loss)
    ref = jnp.mean(jax.scipy.special.logsumexp(logits, axis=-1)
                   - logits[jnp.arange(N), y])
    assert jnp.allclose(loss, ref, rtol=1e-5, atol=1e-5), (loss, ref)

    # Test 2: force the streaming path (2 class tiles, masked partial last tile).
    N2, C2 = 16, 160
    logits2 = jax.random.normal(k3, (N2, C2), dtype=jnp.float32)
    y2 = jax.random.randint(k4, (N2,), 0, C2, dtype=jnp.int32)
    loss2 = cross_entropy_loss(logits2, y2, block_rows=8, block_cols=128)
    jax.block_until_ready(loss2)
    ref2 = jnp.mean(jax.scipy.special.logsumexp(logits2, axis=-1)
                    - logits2[jnp.arange(N2), y2])
    assert jnp.allclose(loss2, ref2, rtol=1e-5, atol=1e-5), (loss2, ref2)

    print("KERNEL_OK")
</pallas_src>

<mosaic_0001>
module attributes {stable_mosaic.version = 11 : i64} {
  func.func @_ce_single_tile_kernel(%arg0: i32, %arg1: memref<8x32xf32, #tpu.memory_space<vmem>>, %arg2: memref<8x1xi32, #tpu.memory_space<vmem>>, %arg3: memref<8x1xf32, #tpu.memory_space<vmem>>) attributes {dimension_semantics = [#tpu.dimension_semantics<parallel>], iteration_bounds = array<i64: 2>, scalar_prefetch = 0 : i64, scratch_operands = 0 : i64, tpu.core_type = #tpu.core_type<tc>, window_params = [{transform_indices = @transform_0, window_bounds = array<i64: 8, 32>}, {transform_indices = @transform_1, window_bounds = array<i64: 8, 1>}, {transform_indices = @transform_2, window_bounds = array<i64: 8, 1>}]} {
    %c0 = arith.constant 0 : index
    %c0_0 = arith.constant 0 : index
    %0 = vector.load %arg1[%c0, %c0_0] : memref<8x32xf32, #tpu.memory_space<vmem>>, vector<8x32xf32>
    %1 = tpu.iota {dimensions = array<i32: 1>} : vector<8x32xi32>
    %c0_1 = arith.constant 0 : index
    %c0_2 = arith.constant 0 : index
    %2 = vector.load %arg2[%c0_1, %c0_2] : memref<8x1xi32, #tpu.memory_space<vmem>>, vector<8x1xi32>
    %cst = arith.constant dense<0xFF800000> : vector<8xf32>
    %3 = vector.multi_reduction <maximumf>, %0, %cst [1] : vector<8x32xf32> to vector<8xf32>
    %4 = vector.shape_cast %3 : vector<8xf32> to vector<8x1xf32>
    %5 = vector.broadcast %4 : vector<8x1xf32> to vector<8x32xf32>
    %6 = arith.subf %0, %5 : vector<8x32xf32>
    %7 = math.exp %6 : vector<8x32xf32>
    %cst_3 = arith.constant dense<0.000000e+00> : vector<8xf32>
    %8 = vector.multi_reduction <add>, %7, %cst_3 [1] : vector<8x32xf32> to vector<8xf32>
    %9 = vector.shape_cast %8 : vector<8xf32> to vector<8x1xf32>
    %10 = math.log %9 : vector<8x1xf32>
    %11 = arith.addf %4, %10 : vector<8x1xf32>
    %12 = vector.broadcast %2 : vector<8x1xi32> to vector<8x32xi32>
    %13 = arith.cmpi eq, %1, %12 : vector<8x32xi32>
    %c0_i32 = arith.constant 0 : i32
    %14 = arith.sitofp %c0_i32 : i32 to f32
    %15 = vector.broadcast %14 : f32 to vector<8x32xf32>
    %16 = arith.select %13, %0, %15 : vector<8x32xi1>, vector<8x32xf32>
    %cst_4 = arith.constant dense<0.000000e+00> : vector<8xf32>
    %17 = vector.multi_reduction <add>, %16, %cst_4 [1] : vector<8x32xf32> to vector<8xf32>
    %18 = vector.shape_cast %17 : vector<8xf32> to vector<8x1xf32>
    %19 = arith.subf %11, %18 : vector<8x1xf32>
    %c0_5 = arith.constant 0 : index
    %c0_6 = arith.constant 0 : index
    %20 = vector.load %arg3[%c0_5, %c0_6] : memref<8x1xf32, #tpu.memory_space<vmem>>, vector<8x1xf32>
    tpu.vector_store %arg3[%c0_5, %c0_6], %19 {strides = array<i32>} : memref<8x1xf32, #tpu.memory_space<vmem>>, vector<8x1xf32>,
    return
  }
  func.func @transform_0(%arg0: i32) -> (i32, i32) {
    %c0_i32 = arith.constant 0 : i32
    %c0_i32_0 = arith.constant 0 : i32
    return %arg0, %c0_i32 : i32, i32
  }
  func.func @transform_1(%arg0: i32) -> (i32, i32) {
    %c0_i32 = arith.constant 0 : i32
    %c0_i32_0 = arith.constant 0 : i32
    return %arg0, %c0_i32 : i32, i32
  }
  func.func @transform_2(%arg0: i32) -> (i32, i32) {
    %c0_i32 = arith.constant 0 : i32
    %c0_i32_0 = arith.constant 0 : i32
    return %arg0, %c0_i32 : i32, i32
  }
}

</mosaic_0001>

<llo_original>
// kernel: tpu_custom_call.1
$region0: #{tpu_custom_call.1}
  #allocation0 [shape = 'u32[]', space=smem, size = 0x4, offset = 0x4, fixed_abs, tag = 'smem constant byte address 0x4 - core index']
  #allocation1 [shape = 'u32[144,128]{1,0:T(1,128)}', space=vmem, size = 0x12000, scoped, tag = 'internal scratch']
  %s0 = inlined_call_operand.vmem [shape: f32[16,32], index: 0, kind: input, shape index: {}]
  %s1 = inlined_call_operand.vmem [shape: s32[16,1], index: 1, kind: input, shape index: {}]
  %s2 = inlined_call_operand.vmem [shape: f32[16,1], index: 2, kind: output, shape index: {}]
  %s3 = sld [smem:[#allocation0]]
  $region41: #{tpu_custom_call.1} parent=0
    _
  %s5 = ssub.s32 1, %s3
  %s6 = scalar_select 0, %s5, %s3
  loop: start=0, step=1, limit=4
  $region2: #{tpu_custom_call.1} parent=0 // loop_pre_header
    _
  $region3: #{tpu_custom_call.1} parent=0 // loop_header
    %s8 = sphi 0, %s12
    %p9 = scmp.ge.s32.totalorder %s8, 4
    %s18 = sphi 0, %s20
    %s21 = sphi 0, %s18
    %s22 = sphi 0, %s21
    %s38 = sphi 0, %s22
    %s44 = sphi 0, %s46
    %s47 = sphi 0, %s44
    %s48 = sphi 0, %s47
    %s64 = sphi 0, %s48
    %s70 = sphi 0, %s72
    %s73 = sphi 0, %s70
    %s74 = sphi 0, %s73
    %s90 = sphi 0, %s74
  $region4: #{tpu_custom_call.1} parent=0 // loop_header_branch
    %11 = sbr.rel (%p9) target = $region8
  $region5: #{tpu_custom_call.1} parent=0 // loop_body
    %s13 = ssub.s32 %s8, 1
    %s14 = ssub.s32 %s8, 2
    %s15 = sadd.s32 %s8, 1
    %s16 = ssub.s32 %s8, %s15
    %p17 = scmp.eq.s32.totalorder %s16, 0
    %s19 = sadd.s32 %s18, 1
    %s20 = scalar_select %p17, %s18, %s19
    %p23 = pneg %p17
    %p24 = scmp.eq.s32.totalorder %s8, 1
    %p25 = por %p23, %p24
    %p26 = scmp.ne.s32.totalorder %s18, %s21
    %p27 = scmp.eq.s32.totalorder %s8, 0
    %p28 = por %p26, %p27
    %p29 = scmp.ne.s32.totalorder %s18, %s21
    %p30 = scmp.eq.s32.totalorder %s13, 1
    %p31 = por %p29, %p30
    %p32 = scmp.ne.s32.totalorder %s21, %s22
    %p33 = scmp.eq.s32.totalorder %s13, 0
    %p34 = por %p32, %p33
    %p35 = scmp.ne.s32.totalorder %s21, %s22
    %p36 = scmp.eq.s32.totalorder %s14, 1
    %p37 = por %p35, %p36
    %p39 = scmp.ne.s32.totalorder %s22, %s38
    %p40 = scmp.eq.s32.totalorder %s14, 0
    %p41 = por %p39, %p40
    %s42 = ssub.s32 %s8, %s15
    %p43 = scmp.eq.s32.totalorder %s42, 0
    %s45 = sadd.s32 %s44, 1
    %s46 = scalar_select %p43, %s44, %s45
    %p49 = pneg %p43
    %p50 = scmp.eq.s32.totalorder %s8, 1
    %p51 = por %p49, %p50
    %p52 = scmp.ne.s32.totalorder %s44, %s47
    %p53 = scmp.eq.s32.totalorder %s8, 0
    %p54 = por %p52, %p53
    %p55 = scmp.ne.s32.totalorder %s44, %s47
    %p56 = scmp.eq.s32.totalorder %s13, 1
    %p57 = por %p55, %p56
    %p58 = scmp.ne.s32.totalorder %s47, %s48
    %p59 = scmp.eq.s32.totalorder %s13, 0
    %p60 = por %p58, %p59
    %p61 = scmp.ne.s32.totalorder %s47, %s48
    %p62 = scmp.eq.s32.totalorder %s14, 1
    %p63 = por %p61, %p62
    %p65 = scmp.ne.s32.totalorder %s48, %s64
    %p66 = scmp.eq.s32.totalorder %s14, 0
    %p67 = por %p65, %p66
    %s68 = ssub.s32 %s8, %s15
    %p69 = scmp.eq.s32.totalorder %s68, 0
    %s71 = sadd.s32 %s70, 1
    %s72 = scalar_select %p69, %s70, %s71
    %p75 = pneg %p69
    %p76 = scmp.eq.s32.totalorder %s8, 1
    %p77 = por %p75, %p76
    %p78 = scmp.ne.s32.totalorder %s70, %s73
    %p79 = scmp.eq.s32.totalorder %s8, 0
    %p80 = por %p78, %p79
    %p81 = scmp.ne.s32.totalorder %s70, %s73
    %p82 = scmp.eq.s32.totalorder %s13, 1
    %p83 = por %p81, %p82
    %p84 = scmp.ne.s32.totalorder %s73, %s74
    %p85 = scmp.eq.s32.totalorder %s13, 0
    %p86 = por %p84, %p85
    %p87 = scmp.ne.s32.totalorder %s73, %s74
    %p88 = scmp.eq.s32.totalorder %s14, 1
    %p89 = por %p87, %p88
    %p91 = scmp.ne.s32.totalorder %s74, %s90
    %p92 = scmp.eq.s32.totalorder %s14, 0
    %p93 = por %p91, %p92
    %p94 = scmp.le.s32.totalorder 1, %s8
    %p95 = scmp.lt.s32.totalorder %s8, 3
    %p96 = pnand %p94, %p95
    %p97 = pneg %p96
    // Predicated region
    $region9: #{tpu_custom_call.1} parent=5 // pred_check
      _
    $region10: #{tpu_custom_call.1} parent=5 // pred_check_branch
      %99 = sbr.rel (%p96) target = $region12
    $region11: #{tpu_custom_call.1} parent=5 // pred_region
      %s100 = ssub.s32 %s8, 1
    $region12: #{tpu_custom_call.1} parent=5 // pred_fallthru
      _
    %p101 = scmp.lt.s32.totalorder %s8, 2
    // Predicated region
    $region13: #{tpu_custom_call.1} parent=5 // pred_check
      %p102 = pneg %p101
    $region14: #{tpu_custom_call.1} parent=5 // pred_check_branch
      %104 = sbr.rel (%p102) target = $region16
    $region15: #{tpu_custom_call.1} parent=5 // pred_region
      // Predicated region
      $region17: #{tpu_custom_call.1} parent=15 // pred_check
        %p105 = pneg %p28
      $region18: #{tpu_custom_call.1} parent=15 // pred_check_branch
        %107 = sbr.rel (%p105) target = $region20
      $region19: #{tpu_custom_call.1} parent=15 // pred_region
        %p108 = scmp.lt.s32.totalorder %s8, 1
        %s109 = scalar_select %p108, %s8, 1
        %s110 = smul.addr %s109, 8
        %s111 = scalar_lea.vmem %s0, %s110
      $region20: #{tpu_custom_call.1} parent=15 // pred_fallthru
        _
      // Predicated region
      $region21: #{tpu_custom_call.1} parent=15 // pred_check
        %p112 = pneg %p54
      $region22: #{tpu_custom_call.1} parent=15 // pred_check_branch
        %114 = sbr.rel (%p112) target = $region24
      $region23: #{tpu_custom_call.1} parent=15 // pred_region
        %p115 = scmp.lt.s32.totalorder %s8, 1
        %s116 = scalar_select %p115, %s8, 1
        %s117 = smul.addr %s116, 8
        %s118 = scalar_lea.vmem %s1, %s117
      $region24: #{tpu_custom_call.1} parent=15 // pred_fallthru
        _
    $region16: #{tpu_custom_call.1} parent=5 // pred_fallthru
      _
    %p119 = scmp.le.s32.totalorder 1, %s8
    %p120 = scmp.lt.s32.totalorder %s8, 3
    %p121 = pnand %p119, %p120
    %p122 = pneg %p121
    // Predicated region
    $region25: #{tpu_custom_call.1} parent=5 // pred_check
      _
    $region26: #{tpu_custom_call.1} parent=5 // pred_check_branch
      %124 = sbr.rel (%p121) target = $region28
    $region27: #{tpu_custom_call.1} parent=5 // pred_region
      %s125 = ssub.s32 %s8, 1
      %p126 = scmp.lt.s32.totalorder %s13, 1
      %s127 = scalar_select %p126, %s13, 1
      %s128 = smul.addr %s127, 8
      %s129 = scalar_lea.vmem %s0, %s128
      %p130 = pneg %p34
      %p131 = pneg %p31
      %p132 = scmp.lt.s32.totalorder %s13, 1
      %s133 = scalar_select %p132, %s13, 1
      %s134 = smul.addr %s133, 8
      %s135 = scalar_lea.vmem %s1, %s134
      %p136 = pneg %p60
      %p137 = pneg %p57
      %p138 = pneg %p86
      %p139 = pneg %p83
      %p140 = scmp.lt.s32.totalorder %s13, 1
      %s141 = scalar_select %p140, %s13, 1
      %s142 = smul.addr %s141, 8
      %s143 = scalar_lea.vmem %s2, %s142
      %p144 = scmp.lt.s32.totalorder %s13, 1
      %s145 = scalar_select %p144, %s13, 1
      %s146 = smul.addr %s145, 8
      %s147 = scalar_lea.vmem %s0, %s146
      %p148 = scmp.lt.s32.totalorder %s13, 1
      %s149 = scalar_select %p148, %s13, 1
      %s150 = smul.addr %s149, 8
      %s151 = scalar_lea.vmem %s1, %s150
      %p152 = scmp.lt.s32.totalorder %s13, 1
      %s153 = scalar_select %p152, %s13, 1
      %s154 = smul.addr %s153, 8
      %s155 = scalar_lea.vmem %s2, %s154
      %v156 = vld [vmem:[%s147] sm:$0xff]
      %v157 = vlaneseq
      %v158 = vand.u32 %v157, 127
      %v159 = vld [vmem:[%s151] sm:$0xff]
      %vm160 = vcmask 261120
      %v161 = vsel %vm160, %v156, -inf
      %162 = vmax.xlane.f32.xlu0 %v161
      %v163 = vpop.xlane.xlu0 %162
      %v164 = vsub.f32 %v156, %v163
      %v165 = vmul.f32 %v164, 1.442695
      %v166 = vpow.pop %v165
      %v167 = vsel %vm160, %v166, 0.0
      %168 = vadd.xlane.f32.xlu0 %v167
      %v169 = vpop.xlane.xlu0 %168
      %v170 = vlog2.pop %v169
      %v171 = vmul.f32 %v170, 0.6931472
      %v172 = vadd.f32 %v163, %v171
      %173 = vset.pattern.permute.xlu0 0
      %174 = vperm.xlu0 %173, %v159
      %v175 = vpop.permute.xlu0 %174
      %vm176 = vcmp.eq.s32.totalorder %v158, %v175
      %v177 = vsel %vm176, %v156, 0.0
      %v178 = vsel %vm160, %v177, 0.0
      %179 = vadd.xlane.f32.xlu0 %v178
      %v180 = vpop.xlane.xlu0 %179
      %v181 = vsub.f32 %v172, %v180
      %vm182 = vcmask 7168
      %183 = vst.msk [vmem:[%s155] sm:$0xff] %vm182, %v181
      %p184 = scmp.lt.s32.totalorder %s13, 1
      %s185 = scalar_select %p184, %s13, 1
      %s186 = smul.addr %s185, 8
      %s187 = scalar_lea.vmem %s2, %s186
      // Predicated region
      $region29: #{tpu_custom_call.1} parent=27 // pred_check
        %p188 = pneg %p83
      $region30: #{tpu_custom_call.1} parent=27 // pred_check_branch
        %190 = sbr.rel (%p188) target = $region32
      $region31: #{tpu_custom_call.1} parent=27 // pred_region
        _
      $region32: #{tpu_custom_call.1} parent=27 // pred_fallthru
        _
    $region28: #{tpu_custom_call.1} parent=5 // pred_fallthru
      _
    %p191 = scmp.le.s32.totalorder 2, %s8
    // Predicated region
    $region33: #{tpu_custom_call.1} parent=5 // pred_check
      %p192 = pneg %p191
    $region34: #{tpu_custom_call.1} parent=5 // pred_check_branch
      %194 = sbr.rel (%p192) target = $region36
    $region35: #{tpu_custom_call.1} parent=5 // pred_region
      %s195 = ssub.s32 %s8, 2
      // Predicated region
      $region37: #{tpu_custom_call.1} parent=35 // pred_check
        %p196 = pneg %p89
      $region38: #{tpu_custom_call.1} parent=35 // pred_check_branch
        %198 = sbr.rel (%p196) target = $region40
      $region39: #{tpu_custom_call.1} parent=35 // pred_region
        %p199 = scmp.lt.s32.totalorder %s14, 1
        %s200 = scalar_select %p199, %s14, 1
        %s201 = smul.addr %s200, 8
        %s202 = scalar_lea.vmem %s2, %s201
      $region40: #{tpu_custom_call.1} parent=35 // pred_fallthru
        _
    $region36: #{tpu_custom_call.1} parent=5 // pred_fallthru
      _
  $region6: #{tpu_custom_call.1} parent=0 // loop_footer
    %s12 = sadd.s32 1, %s8
  $region7: #{tpu_custom_call.1} parent=0 // loop_footer_branch
    %7 = sbr.rel target = $region3
  $region8: #{tpu_custom_call.1} parent=0 // loop_exit
    _

</llo_original>
